<compile_context>
chip_gen: v7x
topology: tpu7x:2x2x1
jax: 0.10.0
libtpu: 0.0.40
codegen_flags: <defaults>
</compile_context>

<pallas_src>
import functools

import jax
import jax.numpy as jnp
from jax import lax
from jax.experimental import pallas as pl
from jax.experimental.pallas import tpu as pltpu


def _round_up(x, m):
    return (x + m - 1) // m * m


def _attn_dot_kernel(dec_ref, enc_ref, wc_ref, wd_ref, attn_ref, align_ref, *,
                     s_valid=None):
    """One (batch b, query-tile q) grid step; all refs are per-batch 2-D tiles."""
    dec = dec_ref[...]                       # (tq, Hp)
    enc = enc_ref[...]                       # (Sp, Hp)
    wc = wc_ref[...]                         # (Hp, Hp)
    wd = wd_ref[...]                         # (Hp, Hp)

    # Scores q.k^T: contract the hidden dims directly so Mosaic feeds the
    # transposed operand straight to the MXU (no XLU transpose of enc).
    scores = lax.dot_general(
        dec.astype(enc.dtype), enc,
        dimension_numbers=(((1,), (1,)), ((), ())),
        preferred_element_type=jnp.float32)              # (tq, Sp) f32

    # Padded source positions (>= s_valid) must not receive probability mass.
    if s_valid is not None:
        col = lax.broadcasted_iota(jnp.int32, scores.shape, 1)
        scores = jnp.where(col < s_valid, scores, -1e30)

    # Softmax over source positions (f32 math).  The denominator is only
    # (tq, 1), so an exact reciprocal is essentially free and keeps the
    # user-visible align_vectors summing to 1.
    m = jnp.max(scores, axis=-1, keepdims=True)
    e = jnp.exp(scores - m)
    probs = e * pl.reciprocal(jnp.sum(e, axis=-1, keepdims=True))

    # Context: probs @ enc.
    c = jnp.dot(probs.astype(enc.dtype), enc,
                preferred_element_type=jnp.float32)      # (tq, Hp) f32

    # Output projection, split-weight form (no lane-axis concat):
    #   tanh(concat([c, dec]) @ W^T) == tanh(c @ Wc + dec @ Wd)
    proj = (jnp.dot(c.astype(wc.dtype), wc, preferred_element_type=jnp.float32)
            + jnp.dot(dec.astype(wd.dtype), wd, preferred_element_type=jnp.float32))

    attn_ref[...] = jnp.tanh(proj).astype(attn_ref.dtype)
    align_ref[...] = probs.astype(align_ref.dtype)


def _vmem_capacity_bytes():
    # Generation aware: 128 MiB on v5e/v6e, 64 MiB on v7x.  Conservative
    # (v7x-sized) fallback if the query is unavailable.
    try:
        return int(getattr(pltpu.get_tpu_info(), "vmem_capacity_bytes", 64 << 20))
    except Exception:
        return 64 << 20


def _working_set_bytes(tq, Sp, Hp, in_isz, out_isz, align_isz):
    # Double-buffered pipeline blocks + f32 in-kernel intermediates (per step).
    blocks = ((tq * Hp + Sp * Hp + 2 * Hp * Hp) * in_isz
              + tq * Hp * out_isz + tq * Sp * align_isz)
    interm = (3 * tq * Sp + 3 * tq * Hp) * 4
    return 2 * blocks + interm


def _pick_tq(B, T, Sp, Hp, in_isz, out_isz, align_isz, budget):
    # Candidates: divisors of T that are sublane multiples (8), plus T itself
    # (a full-dim block is always layout legal).  Prefer the largest that fits.
    cands = sorted({d for d in range(8, T + 1, 8) if T % d == 0} | {T},
                   reverse=True)
    fits = [t for t in cands
            if _working_set_bytes(t, Sp, Hp, in_isz, out_isz, align_isz) <= budget]
    # Never silently fall back to the whole T when nothing fits: take the
    # smallest legal tile instead (best effort).
    pool = fits if fits else [cands[-1]]
    if B == 1:
        # No batch axis to shard across v7x cores -> keep >= 2 parallel q steps.
        two = [t for t in pool if T // t >= 2]
        if two:
            return two[0]
    return pool[0]


def attention_dot(dec_output, enc_output, w_out, *, tq=None,
                  matmul_dtype=None, align_dtype=None):
    """dec_output (B,T,H), enc_output (B,S,H), w_out (H, 2H) as in nn.Linear.

    matmul_dtype: optional lower-precision dtype (e.g. jnp.bfloat16) for the
    MXU inputs (recommended on v5e/v6e/v7x alike); accumulation, softmax and
    tanh stay in f32.  align_dtype defaults to the model dtype.
    """
    B, T, H = dec_output.shape
    Be, S, He = enc_output.shape
    assert (B, H) == (Be, He)
    assert w_out.shape == (H, 2 * H)

    out_dtype = dec_output.dtype
    if align_dtype is None:
        align_dtype = out_dtype

    # Split linear_out weight:  concat([c, dec]) @ W^T == c @ Wc + dec @ Wd
    wc = jnp.transpose(w_out[:, :H])       # (H, H)
    wd = jnp.transpose(w_out[:, H:])       # (H, H)

    # Lane-dense padding: S and H rounded up to multiples of 128 so the attn /
    # align output blocks store with unmasked vst and the MXU operands are
    # aligned.  Zero padding is semantics-preserving except for padded source
    # positions, which the kernel masks before the softmax.
    Hp = _round_up(H, 128)
    Sp = _round_up(S, 128)
    dec_p = dec_output if Hp == H else jnp.pad(dec_output,
                                               ((0, 0), (0, 0), (0, Hp - H)))
    enc_p = enc_output
    if Sp != S or Hp != H:
        enc_p = jnp.pad(enc_output, ((0, 0), (0, Sp - S), (0, Hp - H)))
    if Hp != H:
        wc = jnp.pad(wc, ((0, Hp - H), (0, Hp - H)))
        wd = jnp.pad(wd, ((0, Hp - H), (0, Hp - H)))

    if matmul_dtype is not None:
        # Cast everything (incl. dec) upstream: halves their HBM reads and
        # removes per-tile VPU cast passes inside the kernel.
        dec_p = dec_p.astype(matmul_dtype)
        enc_p = enc_p.astype(matmul_dtype)
        wc = wc.astype(matmul_dtype)
        wd = wd.astype(matmul_dtype)

    in_isz = jnp.dtype(dec_p.dtype).itemsize
    out_isz = jnp.dtype(out_dtype).itemsize
    align_isz = jnp.dtype(align_dtype).itemsize

    vmem_cap = _vmem_capacity_bytes()
    budget = int(vmem_cap * 0.8)
    if tq is None:
        tq = _pick_tq(B, T, Sp, Hp, in_isz, out_isz, align_isz, budget)
    assert T % tq == 0 and (tq % 8 == 0 or tq == T), \
        "tq must divide T and be a multiple of 8 (or the full T)"

    ws = _working_set_bytes(tq, Sp, Hp, in_isz, out_isz, align_isz)
    vmem_limit = int(min(max(ws + (4 << 20), 32 << 20), int(vmem_cap * 0.9)))

    kernel = functools.partial(_attn_dot_kernel,
                               s_valid=(S if Sp != S else None))

    attn_p, align_p = pl.pallas_call(
        kernel,
        out_shape=(
            jax.ShapeDtypeStruct((B, T, Hp), out_dtype),
            jax.ShapeDtypeStruct((B, T, Sp), align_dtype),
        ),
        grid_spec=pltpu.PrefetchScalarGridSpec(
            num_scalar_prefetch=0,
            grid=(B, T // tq),
            in_specs=[
                pl.BlockSpec((None, tq, Hp), lambda b, q: (b, q, 0)),   # dec tile
                pl.BlockSpec((None, Sp, Hp), lambda b, q: (b, 0, 0)),   # enc (per-batch resident)
                pl.BlockSpec((Hp, Hp), lambda b, q: (0, 0)),            # Wc (invariant)
                pl.BlockSpec((Hp, Hp), lambda b, q: (0, 0)),            # Wd (invariant)
            ],
            out_specs=[
                pl.BlockSpec((None, tq, Hp), lambda b, q: (b, q, 0)),   # attn_h tile
                pl.BlockSpec((None, tq, Sp), lambda b, q: (b, q, 0)),   # align tile
            ],
        ),
        compiler_params=pltpu.CompilerParams(
            dimension_semantics=("parallel", "parallel"),
            vmem_limit_bytes=vmem_limit,
        ),
    )(dec_p, enc_p, wc, wd)

    attn_h = attn_p if Hp == H else attn_p[:, :, :H]
    align = align_p if Sp == S else align_p[:, :, :S]

    # PyTorch returns align_vectors as (T, B, S).  The permute stays in the
    # wrapper (a kernel-native (tq,1,S) block is layout-illegal unless B%8==0);
    # fuse it into the downstream consumer where possible.
    return attn_h, jnp.transpose(align, (1, 0, 2))


def _reference(dec, enc, w_out):
    scores = jnp.einsum("bth,bsh->bts", dec, enc)
    probs = jax.nn.softmax(scores, axis=-1)
    c = jnp.einsum("bts,bsh->bth", probs, enc)
    concat = jnp.concatenate([c, dec], axis=-1)
    attn_h = jnp.tanh(jnp.einsum("btk,hk->bth", concat, w_out))
    return attn_h, jnp.transpose(probs, (1, 0, 2))


if __name__ == "__main__":
    B, T, S, H = 2, 8, 8, 32

    key = jax.random.PRNGKey(0)
    k1, k2, k3 = jax.random.split(key, 3)
    dec = jax.random.normal(k1, (B, T, H), dtype=jnp.float32)
    enc = jax.random.normal(k2, (B, S, H), dtype=jnp.float32)
    # linear_out: nn.Linear(2H, H, bias=False) -> weight shape (H, 2H)
    w_out = jax.random.normal(k3, (H, 2 * H), dtype=jnp.float32) * 0.1

    ref_h, ref_a = _reference(dec, enc, w_out)

    # f32 path.
    attn_h, align = attention_dot(dec, enc, w_out)
    jax.block_until_ready((attn_h, align))
    assert attn_h.shape == (B, T, H) and align.shape == (T, B, S)
    # Loose max-abs checks: MXU f32 matmul pass count differs per generation.
    assert float(jnp.max(jnp.abs(attn_h - ref_h))) < 2e-2
    assert float(jnp.max(jnp.abs(align - ref_a))) < 2e-2
    # Exact softmax normalization: returned alignments sum to 1.
    assert float(jnp.max(jnp.abs(jnp.sum(align, axis=-1) - 1.0))) < 1e-3

    # bf16 MXU path (recommended on v5e/v6e/v7x): f32 accumulation + f32 softmax/tanh.
    attn_h16, align16 = attention_dot(dec, enc, w_out, matmul_dtype=jnp.bfloat16)
    jax.block_until_ready((attn_h16, align16))
    assert attn_h16.shape == (B, T, H) and align16.shape == (T, B, S)
    assert float(jnp.max(jnp.abs(attn_h16 - ref_h))) < 0.25

    print("KERNEL_OK")
</pallas_src>

<mosaic_0001>
module attributes {stable_mosaic.version = 11 : i64} {
  func.func @_attn_dot_kernel(%arg0: i32, %arg1: i32, %arg2: memref<1x8x128xf32, #tpu.memory_space<vmem>>, %arg3: memref<1x128x128xf32, #tpu.memory_space<vmem>>, %arg4: memref<128x128xf32, #tpu.memory_space<vmem>>, %arg5: memref<128x128xf32, #tpu.memory_space<vmem>>, %arg6: memref<1x8x128xf32, #tpu.memory_space<vmem>>, %arg7: memref<1x8x128xf32, #tpu.memory_space<vmem>>) attributes {dimension_semantics = [#tpu.dimension_semantics<parallel>, #tpu.dimension_semantics<parallel>], iteration_bounds = array<i64: 2, 1>, scalar_prefetch = 0 : i64, scratch_operands = 0 : i64, tpu.core_type = #tpu.core_type<tc>, window_params = [{transform_indices = @transform_0, window_bounds = array<i64: 1, 8, 128>}, {transform_indices = @transform_1, window_bounds = array<i64: 1, 128, 128>}, {pipeline_mode = #tpu.pipeline_mode<synchronous>, transform_indices = @transform_2, window_bounds = array<i64: 128, 128>}, {pipeline_mode = #tpu.pipeline_mode<synchronous>, transform_indices = @transform_3, window_bounds = array<i64: 128, 128>}, {transform_indices = @transform_4, window_bounds = array<i64: 1, 8, 128>}, {transform_indices = @transform_5, window_bounds = array<i64: 1, 8, 128>}]} {
    %c0 = arith.constant 0 : index
    %c0_0 = arith.constant 0 : index
    %c0_1 = arith.constant 0 : index
    %0 = vector.load %arg2[%c0, %c0_0, %c0_1] : memref<1x8x128xf32, #tpu.memory_space<vmem>>, vector<1x8x128xf32>
    %1 = vector.shape_cast %0 : vector<1x8x128xf32> to vector<8x128xf32>
    %c0_2 = arith.constant 0 : index
    %c0_3 = arith.constant 0 : index
    %c0_4 = arith.constant 0 : index
    %2 = vector.load %arg3[%c0_2, %c0_3, %c0_4] : memref<1x128x128xf32, #tpu.memory_space<vmem>>, vector<1x128x128xf32>
    %3 = vector.shape_cast %2 : vector<1x128x128xf32> to vector<128x128xf32>
    %c0_5 = arith.constant 0 : index
    %c0_6 = arith.constant 0 : index
    %4 = vector.load %arg4[%c0_5, %c0_6] : memref<128x128xf32, #tpu.memory_space<vmem>>, vector<128x128xf32>
    %c0_7 = arith.constant 0 : index
    %c0_8 = arith.constant 0 : index
    %5 = vector.load %arg5[%c0_7, %c0_8] : memref<128x128xf32, #tpu.memory_space<vmem>>, vector<128x128xf32>
    %cst = arith.constant dense<0.000000e+00> : vector<8x128xf32>
    %6 = tpu.matmul %1, %3, %cst {dimension_numbers = #tpu.dot_dimension_numbers<[1], [1], [0], [0], [0, 0, 1, 0], [], []>} : vector<8x128xf32>, vector<128x128xf32>, vector<8x128xf32> -> vector<8x128xf32>
    %7 = tpu.iota {dimensions = array<i32: 1>} : vector<8x128xi32>
    %c8_i32 = arith.constant 8 : i32
    %8 = vector.broadcast %c8_i32 : i32 to vector<8x128xi32>
    %9 = arith.cmpi slt, %7, %8 : vector<8x128xi32>
    %cst_9 = arith.constant -1.000000e+30 : f32
    %10 = vector.broadcast %cst_9 : f32 to vector<8x128xf32>
    %11 = arith.select %9, %6, %10 : vector<8x128xi1>, vector<8x128xf32>
    %cst_10 = arith.constant dense<0xFF800000> : vector<8xf32>
    %12 = vector.multi_reduction <maximumf>, %11, %cst_10 [1] : vector<8x128xf32> to vector<8xf32>
    %13 = vector.shape_cast %12 : vector<8xf32> to vector<8x1xf32>
    %14 = vector.broadcast %13 : vector<8x1xf32> to vector<8x128xf32>
    %15 = arith.subf %11, %14 : vector<8x128xf32>
    %16 = math.exp %15 : vector<8x128xf32>
    %cst_11 = arith.constant dense<0.000000e+00> : vector<8xf32>
    %17 = vector.multi_reduction <add>, %16, %cst_11 [1] : vector<8x128xf32> to vector<8xf32>
    %18 = vector.shape_cast %17 : vector<8xf32> to vector<8x1xf32>
    %19 = tpu.reciprocal %18 : vector<8x1xf32> -> vector<8x1xf32>
    %20 = vector.broadcast %19 : vector<8x1xf32> to vector<8x128xf32>
    %21 = arith.mulf %16, %20 : vector<8x128xf32>
    %cst_12 = arith.constant dense<0.000000e+00> : vector<8x128xf32>
    %22 = tpu.matmul %21, %3, %cst_12 {dimension_numbers = #tpu.dot_dimension_numbers<[1], [0], [0], [1], [0, 0, 1, 1], [], []>} : vector<8x128xf32>, vector<128x128xf32>, vector<8x128xf32> -> vector<8x128xf32>
    %cst_13 = arith.constant dense<0.000000e+00> : vector<8x128xf32>
    %23 = tpu.matmul %22, %4, %cst_13 {dimension_numbers = #tpu.dot_dimension_numbers<[1], [0], [0], [1], [0, 0, 1, 1], [], []>} : vector<8x128xf32>, vector<128x128xf32>, vector<8x128xf32> -> vector<8x128xf32>
    %cst_14 = arith.constant dense<0.000000e+00> : vector<8x128xf32>
    %24 = tpu.matmul %1, %5, %cst_14 {dimension_numbers = #tpu.dot_dimension_numbers<[1], [0], [0], [1], [0, 0, 1, 1], [], []>} : vector<8x128xf32>, vector<128x128xf32>, vector<8x128xf32> -> vector<8x128xf32>
    %25 = arith.addf %23, %24 : vector<8x128xf32>
    %26 = math.tanh %25 : vector<8x128xf32>
    %c0_15 = arith.constant 0 : index
    %c0_16 = arith.constant 0 : index
    %c0_17 = arith.constant 0 : index
    %27 = vector.load %arg6[%c0_15, %c0_16, %c0_17] : memref<1x8x128xf32, #tpu.memory_space<vmem>>, vector<1x8x128xf32>
    %28 = vector.shape_cast %27 : vector<1x8x128xf32> to vector<8x128xf32>
    %29 = vector.shape_cast %26 : vector<8x128xf32> to vector<1x8x128xf32>
    tpu.vector_store %arg6[%c0_15, %c0_16, %c0_17], %29 {strides = array<i32>} : memref<1x8x128xf32, #tpu.memory_space<vmem>>, vector<1x8x128xf32>,
    %c0_18 = arith.constant 0 : index
    %c0_19 = arith.constant 0 : index
    %c0_20 = arith.constant 0 : index
    %30 = vector.load %arg7[%c0_18, %c0_19, %c0_20] : memref<1x8x128xf32, #tpu.memory_space<vmem>>, vector<1x8x128xf32>
    %31 = vector.shape_cast %30 : vector<1x8x128xf32> to vector<8x128xf32>
    %32 = vector.shape_cast %21 : vector<8x128xf32> to vector<1x8x128xf32>
    tpu.vector_store %arg7[%c0_18, %c0_19, %c0_20], %32 {strides = array<i32>} : memref<1x8x128xf32, #tpu.memory_space<vmem>>, vector<1x8x128xf32>,
    return
  }
  func.func @transform_0(%arg0: i32, %arg1: i32) -> (i32, i32, i32) {
    %c0_i32 = arith.constant 0 : i32
    %c0_i32_0 = arith.constant 0 : i32
    return %arg0, %arg1, %c0_i32 : i32, i32, i32
  }
  func.func @transform_1(%arg0: i32, %arg1: i32) -> (i32, i32, i32) {
    %c0_i32 = arith.constant 0 : i32
    %c0_i32_0 = arith.constant 0 : i32
    %c0_i32_1 = arith.constant 0 : i32
    return %arg0, %c0_i32, %c0_i32_0 : i32, i32, i32
  }
  func.func @transform_2(%arg0: i32, %arg1: i32) -> (i32, i32) {
    %c0_i32 = arith.constant 0 : i32
    %c0_i32_0 = arith.constant 0 : i32
    %c0_i32_1 = arith.constant 0 : i32
    return %c0_i32, %c0_i32_0 : i32, i32
  }
  func.func @transform_3(%arg0: i32, %arg1: i32) -> (i32, i32) {
    %c0_i32 = arith.constant 0 : i32
    %c0_i32_0 = arith.constant 0 : i32
    %c0_i32_1 = arith.constant 0 : i32
    return %c0_i32, %c0_i32_0 : i32, i32
  }
  func.func @transform_4(%arg0: i32, %arg1: i32) -> (i32, i32, i32) {
    %c0_i32 = arith.constant 0 : i32
    %c0_i32_0 = arith.constant 0 : i32
    return %arg0, %arg1, %c0_i32 : i32, i32, i32
  }
  func.func @transform_5(%arg0: i32, %arg1: i32) -> (i32, i32, i32) {
    %c0_i32 = arith.constant 0 : i32
    %c0_i32_0 = arith.constant 0 : i32
    return %arg0, %arg1, %c0_i32 : i32, i32, i32
  }
}

</mosaic_0001>

<llo_original>
// kernel: tpu_custom_call.1
$region0: #{tpu_custom_call.1}
  #allocation0 [shape = 'u32[]', space=smem, size = 0x4, offset = 0x4, fixed_abs, tag = 'smem constant byte address 0x4 - core index']
  #allocation1 [shape = 'u32[144,128]{1,0:T(1,128)}', space=vmem, size = 0x12000, scoped, tag = 'internal scratch']
  %s0 = inlined_call_operand.hbm [shape: f32[2,8,128], index: 0, kind: input, shape index: {}]
  %s1 = inlined_call_operand.hbm [shape: f32[2,128,128], index: 1, kind: input, shape index: {}]
  %s2 = inlined_call_operand.hbm [shape: f32[128,128], index: 2, kind: input, shape index: {}]
  %s3 = inlined_call_operand.hbm [shape: f32[128,128], index: 3, kind: input, shape index: {}]
  %s4 = inlined_call_operand.hbm [shape: f32[2,8,128], index: 4, kind: output, shape index: {0}]
  %s5 = inlined_call_operand.hbm [shape: f32[2,8,128], index: 5, kind: output, shape index: {1}]
  %6 = xla_tuple %s4, %s5
  %s7 = sld [smem:[#allocation0]]
  $region73: #{tpu_custom_call.1} parent=0
    _
  %s9 = ssub.s32 1, %s7
  %s10 = scalar_select 0, %s9, %s7
  $region1: #{tpu_custom_call.1} parent=0
    #allocation2 [shape = 'u8[8192]{0}', space=vmem, size = 0x2000, scoped, tag = 'input window, operand 0']
    #allocation3 [shape = 's32[2]{0}', space=sflag, size = 0x8, scoped, tag = 'scoped memory for tpu_custom_call.1']
    #allocation4 [shape = 's32[2]{0}', space=sflag, size = 0x8, scoped, tag = 'scoped memory for tpu_custom_call.1']
    #allocation5 [shape = 'u8[131072]{0}', space=vmem, size = 0x20000, scoped, tag = 'input window, operand 1']
    #allocation6 [shape = 's32[2]{0}', space=sflag, size = 0x8, scoped, tag = 'scoped memory for tpu_custom_call.1']
    #allocation7 [shape = 'u8[65536]{0}', space=vmem, size = 0x10000, scoped, tag = 'input window, operand 2, single buffered']
    #allocation8 [shape = 'u8[65536]{0}', space=vmem, size = 0x10000, scoped, tag = 'input window, operand 3, single buffered']
    #allocation9 [shape = 's32[1]{0}', space=sflag, size = 0x4, scoped, tag = 'scoped memory for tpu_custom_call.1']
    #allocation10 [shape = 'u8[8192]{0}', space=vmem, size = 0x2000, scoped, tag = 'output window, operand 0']
    #allocation11 [shape = 'u8[8192]{0}', space=vmem, size = 0x2000, scoped, tag = 'output window, operand 1']
    #allocation12 [shape = 's32[2]{0}', space=sflag, size = 0x8, scoped, tag = 'scoped memory for tpu_custom_call.1']
    %11 = vsyncpa [#allocation3], 0
    %s12 = scalar_lea.sflag [#allocation3], 1
    %13 = vsyncpa %s12, 0
    %14 = vsyncpa [#allocation6], 0
    %s15 = scalar_lea.sflag [#allocation6], 1
    %16 = vsyncpa %s15, 0
    %17 = vsyncpa [#allocation9], 0
    %18 = vsyncpa [#allocation4], 0
    %s19 = scalar_lea.sflag [#allocation4], 1
    %20 = vsyncpa %s19, 0
    %21 = vsyncpa [#allocation12], 0
    %s22 = scalar_lea.sflag [#allocation12], 1
    %23 = vsyncpa %s22, 0
    loop: start=0, step=1, limit=4
    $region2: #{tpu_custom_call.1} parent=1 // loop_pre_header
      _
    $region3: #{tpu_custom_call.1} parent=1 // loop_header
      %s25 = sphi 0, %s29
      %p26 = scmp.ge.s32.totalorder %s25, 4
      %s32 = sphi 0, %s44
      %s33 = sphi 0, %s40
      %s34 = sphi 0, %s32
      %s35 = sphi 0, %s33
      %s36 = sphi 0, %s34
      %s37 = sphi 0, %s35
      %s49 = sphi 0, %s51
      %s52 = sphi 0, %s49
      %s53 = sphi 0, %s52
      %s69 = sphi 0, %s53
      %s75 = sphi 0, %s77
      %s78 = sphi 0, %s75
      %s79 = sphi 0, %s78
      %s95 = sphi 0, %s79
      %s99 = sphi 0, %s99
      %s101 = sphi 0, %s99
      %s102 = sphi 0, %s101
      %s116 = sphi 0, %s102
      %s120 = sphi 0, %s120
      %s122 = sphi 0, %s120
      %s123 = sphi 0, %s122
      %s137 = sphi 0, %s123
      %s145 = sphi 0, %s147
      %s148 = sphi 0, %s145
      %s149 = sphi 0, %s148
      %s165 = sphi 0, %s149
      %s173 = sphi 0, %s175
      %s176 = sphi 0, %s173
      %s177 = sphi 0, %s176
      %s193 = sphi 0, %s177
    $region4: #{tpu_custom_call.1} parent=1 // loop_header_branch
      %28 = sbr.rel (%p26) target = $region8
    $region5: #{tpu_custom_call.1} parent=1 // loop_body
      %s30 = ssub.s32 %s25, 1
      %s31 = ssub.s32 %s25, 2
      %s38 = sadd.s32 1, %s33
      %p39 = scmp.ge.s32.totalorder %s38, 1
      %s40 = scalar_select %p39, 0, %s38
      %s41 = sadd.s32 1, %s32
      %s42 = scalar_select %p39, %s41, %s32
      %p43 = scmp.ge.s32.totalorder %s42, 2
      %s44 = scalar_select %p43, 0, %s42
      %s45 = ssub.s32 %s32, %s44
      %s46 = ssub.s32 %s33, %s40
      %s47 = sor.u32 %s45, %s46
      %p48 = scmp.eq.s32.totalorder %s47, 0
      %s50 = sadd.s32 %s49, 1
      %s51 = scalar_select %p48, %s49, %s50
      %p54 = pneg %p48
      %p55 = scmp.eq.s32.totalorder %s25, 1
      %p56 = por %p54, %p55
      %p57 = scmp.ne.s32.totalorder %s49, %s52
      %p58 = scmp.eq.s32.totalorder %s25, 0
      %p59 = por %p57, %p58
      %p60 = scmp.ne.s32.totalorder %s49, %s52
      %p61 = scmp.eq.s32.totalorder %s30, 1
      %p62 = por %p60, %p61
      %p63 = scmp.ne.s32.totalorder %s52, %s53
      %p64 = scmp.eq.s32.totalorder %s30, 0
      %p65 = por %p63, %p64
      %p66 = scmp.ne.s32.totalorder %s52, %s53
      %p67 = scmp.eq.s32.totalorder %s31, 1
      %p68 = por %p66, %p67
      %p70 = scmp.ne.s32.totalorder %s53, %s69
      %p71 = scmp.eq.s32.totalorder %s31, 0
      %p72 = por %p70, %p71
      %s73 = ssub.s32 %s32, %s44
      %p74 = scmp.eq.s32.totalorder %s73, 0
      %s76 = sadd.s32 %s75, 1
      %s77 = scalar_select %p74, %s75, %s76
      %p80 = pneg %p74
      %p81 = scmp.eq.s32.totalorder %s25, 1
      %p82 = por %p80, %p81
      %p83 = scmp.ne.s32.totalorder %s75, %s78
      %p84 = scmp.eq.s32.totalorder %s25, 0
      %p85 = por %p83, %p84
      %p86 = scmp.ne.s32.totalorder %s75, %s78
      %p87 = scmp.eq.s32.totalorder %s30, 1
      %p88 = por %p86, %p87
      %p89 = scmp.ne.s32.totalorder %s78, %s79
      %p90 = scmp.eq.s32.totalorder %s30, 0
      %p91 = por %p89, %p90
      %p92 = scmp.ne.s32.totalorder %s78, %s79
      %p93 = scmp.eq.s32.totalorder %s31, 1
      %p94 = por %p92, %p93
      %p96 = scmp.ne.s32.totalorder %s79, %s95
      %p97 = scmp.eq.s32.totalorder %s31, 0
      %p98 = por %p96, %p97
      %s100 = sadd.s32 %s99, 1
      %p103 = scmp.eq.s32.totalorder %s25, 1
      %p104 = scmp.ne.s32.totalorder %s99, %s101
      %p105 = scmp.eq.s32.totalorder %s25, 0
      %p106 = por %p104, %p105
      %p107 = scmp.ne.s32.totalorder %s99, %s101
      %p108 = scmp.eq.s32.totalorder %s30, 1
      %p109 = por %p107, %p108
      %p110 = scmp.ne.s32.totalorder %s101, %s102
      %p111 = scmp.eq.s32.totalorder %s30, 0
      %p112 = por %p110, %p111
      %p113 = scmp.ne.s32.totalorder %s101, %s102
      %p114 = scmp.eq.s32.totalorder %s31, 1
      %p115 = por %p113, %p114
      %p117 = scmp.ne.s32.totalorder %s102, %s116
      %p118 = scmp.eq.s32.totalorder %s31, 0
      %p119 = por %p117, %p118
      %s121 = sadd.s32 %s120, 1
      %p124 = scmp.eq.s32.totalorder %s25, 1
      %p125 = scmp.ne.s32.totalorder %s120, %s122
      %p126 = scmp.eq.s32.totalorder %s25, 0
      %p127 = por %p125, %p126
      %p128 = scmp.ne.s32.totalorder %s120, %s122
      %p129 = scmp.eq.s32.totalorder %s30, 1
      %p130 = por %p128, %p129
      %p131 = scmp.ne.s32.totalorder %s122, %s123
      %p132 = scmp.eq.s32.totalorder %s30, 0
      %p133 = por %p131, %p132
      %p134 = scmp.ne.s32.totalorder %s122, %s123
      %p135 = scmp.eq.s32.totalorder %s31, 1
      %p136 = por %p134, %p135
      %p138 = scmp.ne.s32.totalorder %s123, %s137
      %p139 = scmp.eq.s32.totalorder %s31, 0
      %p140 = por %p138, %p139
      %s141 = ssub.s32 %s32, %s44
      %s142 = ssub.s32 %s33, %s40
      %s143 = sor.u32 %s141, %s142
      %p144 = scmp.eq.s32.totalorder %s143, 0
      %s146 = sadd.s32 %s145, 1
      %s147 = scalar_select %p144, %s145, %s146
      %p150 = pneg %p144
      %p151 = scmp.eq.s32.totalorder %s25, 1
      %p152 = por %p150, %p151
      %p153 = scmp.ne.s32.totalorder %s145, %s148
      %p154 = scmp.eq.s32.totalorder %s25, 0
      %p155 = por %p153, %p154
      %p156 = scmp.ne.s32.totalorder %s145, %s148
      %p157 = scmp.eq.s32.totalorder %s30, 1
      %p158 = por %p156, %p157
      %p159 = scmp.ne.s32.totalorder %s148, %s149
      %p160 = scmp.eq.s32.totalorder %s30, 0
      %p161 = por %p159, %p160
      %p162 = scmp.ne.s32.totalorder %s148, %s149
      %p163 = scmp.eq.s32.totalorder %s31, 1
      %p164 = por %p162, %p163
      %p166 = scmp.ne.s32.totalorder %s149, %s165
      %p167 = scmp.eq.s32.totalorder %s31, 0
      %p168 = por %p166, %p167
      %s169 = ssub.s32 %s32, %s44
      %s170 = ssub.s32 %s33, %s40
      %s171 = sor.u32 %s169, %s170
      %p172 = scmp.eq.s32.totalorder %s171, 0
      %s174 = sadd.s32 %s173, 1
      %s175 = scalar_select %p172, %s173, %s174
      %p178 = pneg %p172
      %p179 = scmp.eq.s32.totalorder %s25, 1
      %p180 = por %p178, %p179
      %p181 = scmp.ne.s32.totalorder %s173, %s176
      %p182 = scmp.eq.s32.totalorder %s25, 0
      %p183 = por %p181, %p182
      %p184 = scmp.ne.s32.totalorder %s173, %s176
      %p185 = scmp.eq.s32.totalorder %s30, 1
      %p186 = por %p184, %p185
      %p187 = scmp.ne.s32.totalorder %s176, %s177
      %p188 = scmp.eq.s32.totalorder %s30, 0
      %p189 = por %p187, %p188
      %p190 = scmp.ne.s32.totalorder %s176, %s177
      %p191 = scmp.eq.s32.totalorder %s31, 1
      %p192 = por %p190, %p191
      %p194 = scmp.ne.s32.totalorder %s177, %s193
      %p195 = scmp.eq.s32.totalorder %s31, 0
      %p196 = por %p194, %p195
      %p197 = scmp.le.s32.totalorder 1, %s25
      %p198 = scmp.lt.s32.totalorder %s25, 3
      %p199 = pnand %p197, %p198
      %p200 = pneg %p199
      // Predicated region
      $region9: #{tpu_custom_call.1} parent=5 // pred_check
        _
      $region10: #{tpu_custom_call.1} parent=5 // pred_check_branch
        %202 = sbr.rel (%p199) target = $region12
      $region11: #{tpu_custom_call.1} parent=5 // pred_region
        %s203 = ssub.s32 %s25, 1
        // Predicated region
        $region13: #{tpu_custom_call.1} parent=11 // pred_check
          %p204 = pneg %p112
        $region14: #{tpu_custom_call.1} parent=11 // pred_check_branch
          %206 = sbr.rel (%p204) target = $region16
        $region15: #{tpu_custom_call.1} parent=11 // pred_region
          %s208 = ssub.s32 2048, 2048
          %209 = vsyncadd [#allocation6], %s208
          %s210 = sshll.u32 [#allocation7], 4
          %s211 = int_to_ptr.vmem [resolvable:$true] %s210
          %216 = dma.hbm_to_vmem [thread:$0]  %s2, 2048, %s211, [#allocation6], 128, 128, 8
        $region16: #{tpu_custom_call.1} parent=11 // pred_fallthru
          _
        // Predicated region
        $region17: #{tpu_custom_call.1} parent=11 // pred_check
          %p217 = pneg %p133
        $region18: #{tpu_custom_call.1} parent=11 // pred_check_branch
          %219 = sbr.rel (%p217) target = $region20
        $region19: #{tpu_custom_call.1} parent=11 // pred_region
          %s221 = ssub.s32 2048, 2048
          %222 = vsyncadd [#allocation9], %s221
          %s223 = sshll.u32 [#allocation8], 4
          %s224 = int_to_ptr.vmem [resolvable:$true] %s223
          %229 = dma.hbm_to_vmem [thread:$0]  %s3, 2048, %s224, [#allocation9], 128, 128, 8
        $region20: #{tpu_custom_call.1} parent=11 // pred_fallthru
          _
      $region12: #{tpu_custom_call.1} parent=5 // pred_fallthru
        _
      %p230 = scmp.lt.s32.totalorder %s25, 2
      // Predicated region
      $region21: #{tpu_custom_call.1} parent=5 // pred_check
        %p231 = pneg %p230
      $region22: #{tpu_custom_call.1} parent=5 // pred_check_branch
        %233 = sbr.rel (%p231) target = $region24
      $region23: #{tpu_custom_call.1} parent=5 // pred_region
        // Predicated region
        $region25: #{tpu_custom_call.1} parent=23 // pred_check
          %p234 = pneg %p59
        $region26: #{tpu_custom_call.1} parent=23 // pred_check_branch
          %236 = sbr.rel (%p234) target = $region28
        $region27: #{tpu_custom_call.1} parent=23 // pred_region
          %s237 = sand.u32 %s49, 1
          %s238 = scalar_lea.sflag [#allocation3], %s237
          %s239 = sand.u32 %s49, 1
          %s240 = smul.addr %s239, 8
          %s241 = scalar_lea.vmem [#allocation2], %s240
          %s243 = ssub.s32 128, 128
          %244 = vsyncadd %s238, %s243
          %s245 = sadd.s32 %s33, %s32
          %s246 = smul.addr %s245, 128
          %s247 = scalar_lea.hbm %s0, %s246
          %s249 = sshll.u32 %s241, 4
          %s250 = int_to_ptr.vmem [resolvable:$true] %s249
          %252 = dma.hbm_to_vmem [thread:$0]  %s247, 128, %s250, %s238
        $region28: #{tpu_custom_call.1} parent=23 // pred_fallthru
          _
        // Predicated region
        $region29: #{tpu_custom_call.1} parent=23 // pred_check
          %p253 = pneg %p85
        $region30: #{tpu_custom_call.1} parent=23 // pred_check_branch
          %255 = sbr.rel (%p253) target = $region32
        $region31: #{tpu_custom_call.1} parent=23 // pred_region
          %s256 = sand.u32 %s25, 1
          %s257 = scalar_lea.sflag [#allocation6], %s256
          %s258 = sand.u32 %s75, 1
          %s259 = smul.addr %s258, 128
          %s260 = scalar_lea.vmem [#allocation5], %s259
          %s262 = ssub.s32 2048, 2048
          %263 = vsyncadd %s257, %s262
          %s264 = smul.addr %s32, 16
          %s265 = smul.addr %s264, 128
          %s266 = scalar_lea.hbm %s1, %s265
          %s267 = sshll.u32 %s260, 4
          %s268 = int_to_ptr.vmem [resolvable:$true] %s267
          %273 = dma.hbm_to_vmem [thread:$0]  %s266, 2048, %s268, %s257, 128, 128, 8
        $region32: #{tpu_custom_call.1} parent=23 // pred_fallthru
          _
      $region24: #{tpu_custom_call.1} parent=5 // pred_fallthru
        _
      %p274 = scmp.le.s32.totalorder 1, %s25
      %p275 = scmp.lt.s32.totalorder %s25, 3
      %p276 = pnand %p274, %p275
      %p277 = pneg %p276
      // Predicated region
      $region33: #{tpu_custom_call.1} parent=5 // pred_check
        _
      $region34: #{tpu_custom_call.1} parent=5 // pred_check_branch
        %279 = sbr.rel (%p276) target = $region36
      $region35: #{tpu_custom_call.1} parent=5 // pred_region
        %s280 = ssub.s32 %s25, 1
        %s281 = sand.u32 %s52, 1
        %s282 = scalar_lea.sflag [#allocation3], %s281
        %s283 = sand.u32 %s52, 1
        %s284 = smul.addr %s283, 8
        %s285 = scalar_lea.vmem [#allocation2], %s284
        // Predicated region
        $region37: #{tpu_custom_call.1} parent=35 // pred_check
          %p286 = pneg %p65
        $region38: #{tpu_custom_call.1} parent=35 // pred_check_branch
          %288 = sbr.rel (%p286) target = $region40
        $region39: #{tpu_custom_call.1} parent=35 // pred_region
          %289 = dma.done %s282, 128
        $region40: #{tpu_custom_call.1} parent=35 // pred_fallthru
          _
        %s290 = sand.u32 %s30, 1
        %s291 = scalar_lea.sflag [#allocation6], %s290
        %s292 = sand.u32 %s78, 1
        %s293 = smul.addr %s292, 128
        %s294 = scalar_lea.vmem [#allocation5], %s293
        // Predicated region
        $region41: #{tpu_custom_call.1} parent=35 // pred_check
          %p295 = pneg %p91
        $region42: #{tpu_custom_call.1} parent=35 // pred_check_branch
          %297 = sbr.rel (%p295) target = $region44
        $region43: #{tpu_custom_call.1} parent=35 // pred_region
          %298 = dma.done %s291, 2048
        $region44: #{tpu_custom_call.1} parent=35 // pred_fallthru
          _
        // Predicated region
        $region45: #{tpu_custom_call.1} parent=35 // pred_check
          %p299 = pneg %p112
        $region46: #{tpu_custom_call.1} parent=35 // pred_check_branch
          %301 = sbr.rel (%p299) target = $region48
        $region47: #{tpu_custom_call.1} parent=35 // pred_region
          %302 = dma.done [#allocation6], 2048
        $region48: #{tpu_custom_call.1} parent=35 // pred_fallthru
          _
        // Predicated region
        $region49: #{tpu_custom_call.1} parent=35 // pred_check
          %p303 = pneg %p133
        $region50: #{tpu_custom_call.1} parent=35 // pred_check_branch
          %305 = sbr.rel (%p303) target = $region52
        $region51: #{tpu_custom_call.1} parent=35 // pred_region
          %306 = dma.done [#allocation9], 2048
        $region52: #{tpu_custom_call.1} parent=35 // pred_fallthru
          _
        %s307 = sand.u32 %s52, 1
        %s308 = scalar_lea.sflag [#allocation3], %s307
        %s309 = sand.u32 %s52, 1
        %s310 = smul.addr %s309, 8
        %s311 = scalar_lea.vmem [#allocation2], %s310
        %p312 = pneg %p65
        %p313 = pneg %p62
        %s314 = sand.u32 %s30, 1
        %s315 = scalar_lea.sflag [#allocation6], %s314
        %s316 = sand.u32 %s78, 1
        %s317 = smul.addr %s316, 128
        %s318 = scalar_lea.vmem [#allocation5], %s317
        %p319 = pneg %p91
        %p320 = pneg %p88
        %p321 = pneg %p112
        %p322 = pneg %p109
        %p323 = pneg %p133
        %p324 = pneg %p130
        %p325 = pneg %p161
        %p326 = pneg %p158
        %s327 = sand.u32 %s148, 1
        %s328 = scalar_lea.sflag [#allocation4], %s327
        %s329 = sand.u32 %s148, 1
        %s330 = smul.addr %s329, 8
        %s331 = scalar_lea.vmem [#allocation10], %s330
        %p332 = pneg %p189
        %p333 = pneg %p186
        %s334 = sand.u32 %s176, 1
        %s335 = scalar_lea.sflag [#allocation12], %s334
        %s336 = sand.u32 %s176, 1
        %s337 = smul.addr %s336, 8
        %s338 = scalar_lea.vmem [#allocation11], %s337
        %v339 = vld [vmem:[%s285] sm:$0xff]
        %v340 = vld [vmem:[%s294] sm:$0xff]
        %v341 = vld [vmem:[%s294 + $0x8] sm:$0xff]
        %v342 = vld [vmem:[%s294 + $0x10] sm:$0xff]
        %v343 = vld [vmem:[%s294 + $0x18] sm:$0xff]
        %v344 = vld [vmem:[%s294 + $0x20] sm:$0xff]
        %v345 = vld [vmem:[%s294 + $0x28] sm:$0xff]
        %v346 = vld [vmem:[%s294 + $0x30] sm:$0xff]
        %v347 = vld [vmem:[%s294 + $0x38] sm:$0xff]
        %v348 = vld [vmem:[%s294 + $0x40] sm:$0xff]
        %v349 = vld [vmem:[%s294 + $0x48] sm:$0xff]
        %v350 = vld [vmem:[%s294 + $0x50] sm:$0xff]
        %v351 = vld [vmem:[%s294 + $0x58] sm:$0xff]
        %v352 = vld [vmem:[%s294 + $0x60] sm:$0xff]
        %v353 = vld [vmem:[%s294 + $0x68] sm:$0xff]
        %v354 = vld [vmem:[%s294 + $0x70] sm:$0xff]
        %v355 = vld [vmem:[%s294 + $0x78] sm:$0xff]
        %v356 = vld [vmem:[#allocation7] sm:$0xff]
        %v357 = vld [vmem:[#allocation7 + $0x8] sm:$0xff]
        %v358 = vld [vmem:[#allocation7 + $0x10] sm:$0xff]
        %v359 = vld [vmem:[#allocation7 + $0x18] sm:$0xff]
        %v360 = vld [vmem:[#allocation7 + $0x20] sm:$0xff]
        %v361 = vld [vmem:[#allocation7 + $0x28] sm:$0xff]
        %v362 = vld [vmem:[#allocation7 + $0x30] sm:$0xff]
        %v363 = vld [vmem:[#allocation7 + $0x38] sm:$0xff]
        %v364 = vld [vmem:[#allocation7 + $0x40] sm:$0xff]
        %v365 = vld [vmem:[#allocation7 + $0x48] sm:$0xff]
        %v366 = vld [vmem:[#allocation7 + $0x50] sm:$0xff]
        %v367 = vld [vmem:[#allocation7 + $0x58] sm:$0xff]
        %v368 = vld [vmem:[#allocation7 + $0x60] sm:$0xff]
        %v369 = vld [vmem:[#allocation7 + $0x68] sm:$0xff]
        %v370 = vld [vmem:[#allocation7 + $0x70] sm:$0xff]
        %v371 = vld [vmem:[#allocation7 + $0x78] sm:$0xff]
        %v372 = vld [vmem:[#allocation8] sm:$0xff]
        %v373 = vld [vmem:[#allocation8 + $0x8] sm:$0xff]
        %v374 = vld [vmem:[#allocation8 + $0x10] sm:$0xff]
        %v375 = vld [vmem:[#allocation8 + $0x18] sm:$0xff]
        %v376 = vld [vmem:[#allocation8 + $0x20] sm:$0xff]
        %v377 = vld [vmem:[#allocation8 + $0x28] sm:$0xff]
        %v378 = vld [vmem:[#allocation8 + $0x30] sm:$0xff]
        %v379 = vld [vmem:[#allocation8 + $0x38] sm:$0xff]
        %v380 = vld [vmem:[#allocation8 + $0x40] sm:$0xff]
        %v381 = vld [vmem:[#allocation8 + $0x48] sm:$0xff]
        %v382 = vld [vmem:[#allocation8 + $0x50] sm:$0xff]
        %v383 = vld [vmem:[#allocation8 + $0x58] sm:$0xff]
        %v384 = vld [vmem:[#allocation8 + $0x60] sm:$0xff]
        %v385 = vld [vmem:[#allocation8 + $0x68] sm:$0xff]
        %v386 = vld [vmem:[#allocation8 + $0x70] sm:$0xff]
        %v387 = vld [vmem:[#allocation8 + $0x78] sm:$0xff]
        %388 = vmatprep.subr.mxu0 0.0
        %389 = vmatpush1.xpose.msra.mxu0 %v340
        %390 = vmatprep.subr.mxu0 0.0
        %391 = vmatpush1.xpose.msra.mxu0 %v341
        %392 = vmatprep.subr.mxu0 0.0
        %393 = vmatpush1.xpose.msra.mxu0 %v342
        %394 = vmatprep.subr.mxu0 0.0
        %395 = vmatpush1.xpose.msra.mxu0 %v343
        %396 = vmatprep.subr.mxu0 0.0
        %397 = vmatpush1.xpose.msra.mxu0 %v344
        %398 = vmatprep.subr.mxu0 0.0
        %399 = vmatpush1.xpose.msra.mxu0 %v345
        %400 = vmatprep.subr.mxu0 0.0
        %401 = vmatpush1.xpose.msra.mxu0 %v346
        %402 = vmatprep.subr.mxu0 0.0
        %403 = vmatpush1.xpose.msra.mxu0 %v347
        %404 = vmatprep.subr.mxu0 0.0
        %405 = vmatpush1.xpose.msra.mxu0 %v348
        %406 = vmatprep.subr.mxu0 0.0
        %407 = vmatpush1.xpose.msra.mxu0 %v349
        %408 = vmatprep.subr.mxu0 0.0
        %409 = vmatpush1.xpose.msra.mxu0 %v350
        %410 = vmatprep.subr.mxu0 0.0
        %411 = vmatpush1.xpose.msra.mxu0 %v351
        %412 = vmatprep.subr.mxu0 0.0
        %413 = vmatpush1.xpose.msra.mxu0 %v352
        %414 = vmatprep.subr.mxu0 0.0
        %415 = vmatpush1.xpose.msra.mxu0 %v353
        %416 = vmatprep.subr.mxu0 0.0
        %417 = vmatpush1.xpose.msra.mxu0 %v354
        %418 = vmatprep.subr.mxu0 0.0
        %419 = vmatpush1.xpose.msra.mxu0 %v355
        %420 = vmatprep.subr.mxu0 0.0
        %421 = vmatpush1.xpose.msra.mxu0 0.0
        %422 = vmatprep.subr.mxu0 0.0
        %423 = vmatpush1.xpose.msra.mxu0 0.0
        %424 = vmatprep.subr.mxu0 0.0
        %425 = vmatpush1.xpose.msra.mxu0 0.0
        %426 = vmatprep.subr.mxu0 0.0
        %427 = vmatpush1.xpose.msra.mxu0 0.0
        %428 = vmatprep.subr.mxu0 0.0
        %429 = vmatpush1.xpose.msra.mxu0 0.0
        %430 = vmatprep.subr.mxu0 0.0
        %431 = vmatpush1.xpose.msra.mxu0 0.0
        %432 = vmatprep.subr.mxu0 0.0
        %433 = vmatpush1.xpose.msra.mxu0 0.0
        %434 = vmatprep.subr.mxu0 0.0
        %435 = vmatpush1.xpose.msra.mxu0 0.0
        %436 = vmatprep.subr.mxu0 0.0
        %437 = vmatpush1.xpose.msra.mxu0 0.0
        %438 = vmatprep.subr.mxu0 0.0
        %439 = vmatpush1.xpose.msra.mxu0 0.0
        %440 = vmatprep.subr.mxu0 0.0
        %441 = vmatpush1.xpose.msra.mxu0 0.0
        %442 = vmatprep.subr.mxu0 0.0
        %443 = vmatpush1.xpose.msra.mxu0 0.0
        %444 = vmatprep.subr.mxu0 0.0
        %445 = vmatpush1.xpose.msra.mxu0 0.0
        %446 = vmatprep.subr.mxu0 0.0
        %447 = vmatpush1.xpose.msra.mxu0 0.0
        %448 = vmatprep.subr.mxu0 0.0
        %449 = vmatpush1.xpose.msra.mxu0 0.0
        %450 = vmatprep.subr.mxu0 0.0
        %451 = vmatpush1.xpose.msra.mxu0 0.0
        %452 = vmatprep.mubr.f32.mxu0 0.0
        %453 = vmatmul.mubr.f32.gmra.mrb[0].mxu0 %v339
        %v454 = vpop.f32.mrb[0].mxu0
        %v455 = vadd.f32 0.0, %v454
        %v456 = vpop.f32.mrb[0].mxu0
        %457 = vdwg.mxu0
        %v458 = vlaneseq
        %v459 = vand.u32 %v458, 127
        %vm460 = vcmp.lt.s32.totalorder %v459, 8
        %v461 = vsel %vm460, %v455, -1e+30
        %462 = vmax.xlane.f32.xlu0 %v461
        %v463 = vpop.xlane.xlu0 %462
        %v464 = vsub.f32 %v461, %v463
        %v465 = vmul.f32 %v464, 1.442695
        %v466 = vpow.pop %v465
        %467 = vadd.xlane.f32.xlu0 %v466
        %v468 = vpop.xlane.xlu0 %467
        %v469 = vrcp.pop %v468
        %v470 = vmul.f32 %v466, %v469
        %471 = vmatprep.subr.mxu0 0.0
        %472 = vmatpush1.msra.mxu0 %v340
        %473 = vmatprep.subr.mxu0 0.0
        %474 = vmatpush1.msra.mxu0 %v341
        %475 = vmatprep.subr.mxu0 0.0
        %476 = vmatpush1.msra.mxu0 %v342
        %477 = vmatprep.subr.mxu0 0.0
        %478 = vmatpush1.msra.mxu0 %v343
        %479 = vmatprep.subr.mxu0 0.0
        %480 = vmatpush1.msra.mxu0 %v344
        %481 = vmatprep.subr.mxu0 0.0
        %482 = vmatpush1.msra.mxu0 %v345
        %483 = vmatprep.subr.mxu0 0.0
        %484 = vmatpush1.msra.mxu0 %v346
        %485 = vmatprep.subr.mxu0 0.0
        %486 = vmatpush1.msra.mxu0 %v347
        %487 = vmatprep.subr.mxu0 0.0
        %488 = vmatpush1.msra.mxu0 %v348
        %489 = vmatprep.subr.mxu0 0.0
        %490 = vmatpush1.msra.mxu0 %v349
        %491 = vmatprep.subr.mxu0 0.0
        %492 = vmatpush1.msra.mxu0 %v350
        %493 = vmatprep.subr.mxu0 0.0
        %494 = vmatpush1.msra.mxu0 %v351
        %495 = vmatprep.subr.mxu0 0.0
        %496 = vmatpush1.msra.mxu0 %v352
        %497 = vmatprep.subr.mxu0 0.0
        %498 = vmatpush1.msra.mxu0 %v353
        %499 = vmatprep.subr.mxu0 0.0
        %500 = vmatpush1.msra.mxu0 %v354
        %501 = vmatprep.subr.mxu0 0.0
        %502 = vmatpush1.msra.mxu0 %v355
        %503 = vmatprep.subr.mxu0 0.0
        %504 = vmatpush1.msra.mxu0 0.0
        %505 = vmatprep.subr.mxu0 0.0
        %506 = vmatpush1.msra.mxu0 0.0
        %507 = vmatprep.subr.mxu0 0.0
        %508 = vmatpush1.msra.mxu0 0.0
        %509 = vmatprep.subr.mxu0 0.0
        %510 = vmatpush1.msra.mxu0 0.0
        %511 = vmatprep.subr.mxu0 0.0
        %512 = vmatpush1.msra.mxu0 0.0
        %513 = vmatprep.subr.mxu0 0.0
        %514 = vmatpush1.msra.mxu0 0.0
        %515 = vmatprep.subr.mxu0 0.0
        %516 = vmatpush1.msra.mxu0 0.0
        %517 = vmatprep.subr.mxu0 0.0
        %518 = vmatpush1.msra.mxu0 0.0
        %519 = vmatprep.subr.mxu0 0.0
        %520 = vmatpush1.msra.mxu0 0.0
        %521 = vmatprep.subr.mxu0 0.0
        %522 = vmatpush1.msra.mxu0 0.0
        %523 = vmatprep.subr.mxu0 0.0
        %524 = vmatpush1.msra.mxu0 0.0
        %525 = vmatprep.subr.mxu0 0.0
        %526 = vmatpush1.msra.mxu0 0.0
        %527 = vmatprep.subr.mxu0 0.0
        %528 = vmatpush1.msra.mxu0 0.0
        %529 = vmatprep.subr.mxu0 0.0
        %530 = vmatpush1.msra.mxu0 0.0
        %531 = vmatprep.subr.mxu0 0.0
        %532 = vmatpush1.msra.mxu0 0.0
        %533 = vmatprep.subr.mxu0 0.0
        %534 = vmatpush1.msra.mxu0 0.0
        %535 = vmatprep.mubr.f32.mxu0 0.0
        %536 = vmatmul.mubr.f32.gmra.mrb[0].mxu0 %v470
        %v537 = vpop.f32.mrb[0].mxu0
        %v538 = vadd.f32 0.0, %v537
        %v539 = vpop.f32.mrb[0].mxu0
        %540 = vdwg.mxu0
        %541 = vmatprep.subr.mxu0 0.0
        %542 = vmatpush1.msra.mxu0 %v372
        %543 = vmatprep.subr.mxu0 0.0
        %544 = vmatpush1.msra.mxu0 %v373
        %545 = vmatprep.subr.mxu0 0.0
        %546 = vmatpush1.msra.mxu0 %v374
        %547 = vmatprep.subr.mxu0 0.0
        %548 = vmatpush1.msra.mxu0 %v375
        %549 = vmatprep.subr.mxu0 0.0
        %550 = vmatpush1.msra.mxu0 %v376
        %551 = vmatprep.subr.mxu0 0.0
        %552 = vmatpush1.msra.mxu0 %v377
        %553 = vmatprep.subr.mxu0 0.0
        %554 = vmatpush1.msra.mxu0 %v378
        %555 = vmatprep.subr.mxu0 0.0
        %556 = vmatpush1.msra.mxu0 %v379
        %557 = vmatprep.subr.mxu0 0.0
        %558 = vmatpush1.msra.mxu0 %v380
        %559 = vmatprep.subr.mxu0 0.0
        %560 = vmatpush1.msra.mxu0 %v381
        %561 = vmatprep.subr.mxu0 0.0
        %562 = vmatpush1.msra.mxu0 %v382
        %563 = vmatprep.subr.mxu0 0.0
        %564 = vmatpush1.msra.mxu0 %v383
        %565 = vmatprep.subr.mxu0 0.0
        %566 = vmatpush1.msra.mxu0 %v384
        %567 = vmatprep.subr.mxu0 0.0
        %568 = vmatpush1.msra.mxu0 %v385
        %569 = vmatprep.subr.mxu0 0.0
        %570 = vmatpush1.msra.mxu0 %v386
        %571 = vmatprep.subr.mxu0 0.0
        %572 = vmatpush1.msra.mxu0 %v387
        %573 = vmatprep.subr.mxu0 0.0
        %574 = vmatpush1.msra.mxu0 0.0
        %575 = vmatprep.subr.mxu0 0.0
        %576 = vmatpush1.msra.mxu0 0.0
        %577 = vmatprep.subr.mxu0 0.0
        %578 = vmatpush1.msra.mxu0 0.0
        %579 = vmatprep.subr.mxu0 0.0
        %580 = vmatpush1.msra.mxu0 0.0
        %581 = vmatprep.subr.mxu0 0.0
        %582 = vmatpush1.msra.mxu0 0.0
        %583 = vmatprep.subr.mxu0 0.0
        %584 = vmatpush1.msra.mxu0 0.0
        %585 = vmatprep.subr.mxu0 0.0
        %586 = vmatpush1.msra.mxu0 0.0
        %587 = vmatprep.subr.mxu0 0.0
        %588 = vmatpush1.msra.mxu0 0.0
        %589 = vmatprep.subr.mxu0 0.0
        %590 = vmatpush1.msra.mxu0 0.0
        %591 = vmatprep.subr.mxu0 0.0
        %592 = vmatpush1.msra.mxu0 0.0
        %593 = vmatprep.subr.mxu0 0.0
        %594 = vmatpush1.msra.mxu0 0.0
        %595 = vmatprep.subr.mxu0 0.0
        %596 = vmatpush1.msra.mxu0 0.0
        %597 = vmatprep.subr.mxu0 0.0
        %598 = vmatpush1.msra.mxu0 0.0
        %599 = vmatprep.subr.mxu0 0.0
        %600 = vmatpush1.msra.mxu0 0.0
        %601 = vmatprep.subr.mxu0 0.0
        %602 = vmatpush1.msra.mxu0 0.0
        %603 = vmatprep.subr.mxu0 0.0
        %604 = vmatpush1.msra.mxu0 0.0
        %605 = vmatprep.mubr.f32.mxu0 0.0
        %606 = vmatmul.mubr.f32.gmra.mrb[0].mxu0 %v339
        %v607 = vpop.f32.mrb[0].mxu0
        %v608 = vadd.f32 0.0, %v607
        %v609 = vpop.f32.mrb[0].mxu0
        %610 = vdwg.mxu0
        %611 = vmatprep.subr.mxu0 0.0
        %612 = vmatpush1.msra.mxu0 %v356
        %613 = vmatprep.subr.mxu0 0.0
        %614 = vmatpush1.msra.mxu0 %v357
        %615 = vmatprep.subr.mxu0 0.0
        %616 = vmatpush1.msra.mxu0 %v358
        %617 = vmatprep.subr.mxu0 0.0
        %618 = vmatpush1.msra.mxu0 %v359
        %619 = vmatprep.subr.mxu0 0.0
        %620 = vmatpush1.msra.mxu0 %v360
        %621 = vmatprep.subr.mxu0 0.0
        %622 = vmatpush1.msra.mxu0 %v361
        %623 = vmatprep.subr.mxu0 0.0
        %624 = vmatpush1.msra.mxu0 %v362
        %625 = vmatprep.subr.mxu0 0.0
        %626 = vmatpush1.msra.mxu0 %v363
        %627 = vmatprep.subr.mxu0 0.0
        %628 = vmatpush1.msra.mxu0 %v364
        %629 = vmatprep.subr.mxu0 0.0
        %630 = vmatpush1.msra.mxu0 %v365
        %631 = vmatprep.subr.mxu0 0.0
        %632 = vmatpush1.msra.mxu0 %v366
        %633 = vmatprep.subr.mxu0 0.0
        %634 = vmatpush1.msra.mxu0 %v367
        %635 = vmatprep.subr.mxu0 0.0
        %636 = vmatpush1.msra.mxu0 %v368
        %637 = vmatprep.subr.mxu0 0.0
        %638 = vmatpush1.msra.mxu0 %v369
        %639 = vmatprep.subr.mxu0 0.0
        %640 = vmatpush1.msra.mxu0 %v370
        %641 = vmatprep.subr.mxu0 0.0
        %642 = vmatpush1.msra.mxu0 %v371
        %643 = vmatprep.subr.mxu0 0.0
        %644 = vmatpush1.msra.mxu0 0.0
        %645 = vmatprep.subr.mxu0 0.0
        %646 = vmatpush1.msra.mxu0 0.0
        %647 = vmatprep.subr.mxu0 0.0
        %648 = vmatpush1.msra.mxu0 0.0
        %649 = vmatprep.subr.mxu0 0.0
        %650 = vmatpush1.msra.mxu0 0.0
        %651 = vmatprep.subr.mxu0 0.0
        %652 = vmatpush1.msra.mxu0 0.0
        %653 = vmatprep.subr.mxu0 0.0
        %654 = vmatpush1.msra.mxu0 0.0
        %655 = vmatprep.subr.mxu0 0.0
        %656 = vmatpush1.msra.mxu0 0.0
        %657 = vmatprep.subr.mxu0 0.0
        %658 = vmatpush1.msra.mxu0 0.0
        %659 = vmatprep.subr.mxu0 0.0
        %660 = vmatpush1.msra.mxu0 0.0
        %661 = vmatprep.subr.mxu0 0.0
        %662 = vmatpush1.msra.mxu0 0.0
        %663 = vmatprep.subr.mxu0 0.0
        %664 = vmatpush1.msra.mxu0 0.0
        %665 = vmatprep.subr.mxu0 0.0
        %666 = vmatpush1.msra.mxu0 0.0
        %667 = vmatprep.subr.mxu0 0.0
        %668 = vmatpush1.msra.mxu0 0.0
        %669 = vmatprep.subr.mxu0 0.0
        %670 = vmatpush1.msra.mxu0 0.0
        %671 = vmatprep.subr.mxu0 0.0
        %672 = vmatpush1.msra.mxu0 0.0
        %673 = vmatprep.subr.mxu0 0.0
        %674 = vmatpush1.msra.mxu0 0.0
        %675 = vmatprep.mubr.f32.mxu0 0.0
        %676 = vmatmul.mubr.f32.gmra.mrb[0].mxu0 %v538
        %v677 = vpop.f32.mrb[0].mxu0
        %v678 = vadd.f32 %v608, %v677
        %v679 = vpop.f32.mrb[0].mxu0
        %680 = vdwg.mxu0
        %v681 = vtanh.pop %v678
        %682 = vst [vmem:[%s331] sm:$0xff] %v681
        %683 = vst [vmem:[%s338] sm:$0xff] %v470
        %s684 = sand.u32 %s148, 1
        %s685 = scalar_lea.sflag [#allocation4], %s684
        %s686 = sand.u32 %s148, 1
        %s687 = smul.addr %s686, 8
        %s688 = scalar_lea.vmem [#allocation10], %s687
        %s689 = sand.u32 %s176, 1
        %s690 = scalar_lea.sflag [#allocation12], %s689
        %s691 = sand.u32 %s176, 1
        %s692 = smul.addr %s691, 8
        %s693 = scalar_lea.vmem [#allocation11], %s692
        // Predicated region
        $region53: #{tpu_custom_call.1} parent=35 // pred_check
          %p694 = pneg %p158
        $region54: #{tpu_custom_call.1} parent=35 // pred_check_branch
          %696 = sbr.rel (%p694) target = $region56
        $region55: #{tpu_custom_call.1} parent=35 // pred_region
          %s698 = ssub.s32 128, 128
          %699 = vsyncadd %s685, %s698
          %s700 = sadd.s32 %s35, %s34
          %s701 = smul.addr %s700, 128
          %s702 = scalar_lea.hbm %s4, %s701
          %s704 = sshll.u32 %s688, 4
          %s705 = int_to_ptr.vmem [resolvable:$true] %s704
          %707 = dma.vmem_to_hbm [thread:$0]  %s705, 128, %s702, %s685
        $region56: #{tpu_custom_call.1} parent=35 // pred_fallthru
          _
        // Predicated region
        $region57: #{tpu_custom_call.1} parent=35 // pred_check
          %p708 = pneg %p186
        $region58: #{tpu_custom_call.1} parent=35 // pred_check_branch
          %710 = sbr.rel (%p708) target = $region60
        $region59: #{tpu_custom_call.1} parent=35 // pred_region
          %s712 = ssub.s32 128, 128
          %713 = vsyncadd %s690, %s712
          %s714 = sadd.s32 %s35, %s34
          %s715 = smul.addr %s714, 128
          %s716 = scalar_lea.hbm %s5, %s715
          %s718 = sshll.u32 %s693, 4
          %s719 = int_to_ptr.vmem [resolvable:$true] %s718
          %721 = dma.vmem_to_hbm [thread:$0]  %s719, 128, %s716, %s690
        $region60: #{tpu_custom_call.1} parent=35 // pred_fallthru
          _
      $region36: #{tpu_custom_call.1} parent=5 // pred_fallthru
        _
      %p722 = scmp.le.s32.totalorder 2, %s25
      // Predicated region
      $region61: #{tpu_custom_call.1} parent=5 // pred_check
        %p723 = pneg %p722
      $region62: #{tpu_custom_call.1} parent=5 // pred_check_branch
        %725 = sbr.rel (%p723) target = $region64
      $region63: #{tpu_custom_call.1} parent=5 // pred_region
        %s726 = ssub.s32 %s25, 2
        // Predicated region
        $region65: #{tpu_custom_call.1} parent=63 // pred_check
          %p727 = pneg %p164
        $region66: #{tpu_custom_call.1} parent=63 // pred_check_branch
          %729 = sbr.rel (%p727) target = $region68
        $region67: #{tpu_custom_call.1} parent=63 // pred_region
          %s730 = sand.u32 %s149, 1
          %s731 = scalar_lea.sflag [#allocation4], %s730
          %s732 = sand.u32 %s149, 1
          %s733 = smul.addr %s732, 8
          %s734 = scalar_lea.vmem [#allocation10], %s733
          %735 = dma.done %s731, 128
        $region68: #{tpu_custom_call.1} parent=63 // pred_fallthru
          _
        // Predicated region
        $region69: #{tpu_custom_call.1} parent=63 // pred_check
          %p736 = pneg %p192
        $region70: #{tpu_custom_call.1} parent=63 // pred_check_branch
          %738 = sbr.rel (%p736) target = $region72
        $region71: #{tpu_custom_call.1} parent=63 // pred_region
          %s739 = sand.u32 %s177, 1
          %s740 = scalar_lea.sflag [#allocation12], %s739
          %s741 = sand.u32 %s177, 1
          %s742 = smul.addr %s741, 8
          %s743 = scalar_lea.vmem [#allocation11], %s742
          %744 = dma.done %s740, 128
        $region72: #{tpu_custom_call.1} parent=63 // pred_fallthru
          _
      $region64: #{tpu_custom_call.1} parent=5 // pred_fallthru
        _
    $region6: #{tpu_custom_call.1} parent=1 // loop_footer
      %s29 = sadd.s32 1, %s25
    $region7: #{tpu_custom_call.1} parent=1 // loop_footer_branch
      %24 = sbr.rel target = $region3
    $region8: #{tpu_custom_call.1} parent=1 // loop_exit
      _
    %745 = vsyncpa [#allocation3], 1
    %s746 = scalar_lea.sflag [#allocation3], 1
    %747 = vsyncpa %s746, 1
    %748 = vsyncpa [#allocation6], 1
    %s749 = scalar_lea.sflag [#allocation6], 1
    %750 = vsyncpa %s749, 1
    %751 = vsyncpa [#allocation9], 1
    %752 = vsyncpa [#allocation4], 1
    %s753 = scalar_lea.sflag [#allocation4], 1
    %754 = vsyncpa %s753, 1
    %755 = vsyncpa [#allocation12], 1
    %s756 = scalar_lea.sflag [#allocation12], 1
    %757 = vsyncpa %s756, 1

</llo_original>
